<compile_context>
chip_gen: v6e
topology: v6e:2x2x1
jax: 0.10.0
libtpu: 0.0.40
codegen_flags: <defaults>
</compile_context>

<pallas_src>
from itertools import permutations

import numpy as np
import jax
import jax.numpy as jnp
from jax.experimental import pallas as pl
from jax.experimental.pallas import tpu as pltpu

NUM_HEADS = 5
_PERMS = tuple(permutations(range(NUM_HEADS)))
NUM_PERMS = len(_PERMS)  # 120


def _perm_matrix():
    """(NUM_PERMS, H*H) selection matrix: row p has ones at index perm_p[k]*H + k."""
    H = NUM_HEADS
    P = np.zeros((NUM_PERMS, H * H), np.float32)
    for p, perm in enumerate(_PERMS):
        for k in range(H):
            P[p, perm[k] * H + k] = 1.0
    return jnp.asarray(P)


def _perm_loss_kernel(perm_ref, pred_ref, tgt_ref, out_ref):
    # pred_ref / tgt_ref: (H, C, TB) with the batch tile on the 128-lane axis.
    H, C, TB = pred_ref.shape
    K = H

    tgt = tgt_ref[...].astype(jnp.float32)                                       # (K, C, TB)

    # Target class = first argmax over classes (matches torch.argmax), as a one-hot over C.
    cidx = jax.lax.broadcasted_iota(jnp.int32, (K, C, TB), 1)
    tmax = jnp.max(tgt, axis=1, keepdims=True)                                   # (K, 1, TB)
    first_idx = jnp.min(jnp.where(tgt == tmax, cidx, C), axis=1, keepdims=True)  # (K, 1, TB)
    onehot = (cidx == first_idx).astype(jnp.float32)                             # (K, C, TB)

    # Pairwise CE rows, built per prediction head (static 5-way unroll, no (H,K,C) broadcast):
    #   L_flat[h*K + k, b] = lse(pred[h, :, b]) - pred[h, cls_k(b), b]
    rows = []
    for h in range(H):
        p_h = pred_ref[h].astype(jnp.float32)                                    # (C, TB)
        m = jnp.max(p_h, axis=0, keepdims=True)                                  # (1, TB)
        lse = m + jnp.log(jnp.sum(jnp.exp(p_h - m), axis=0, keepdims=True))      # (1, TB)
        pac = jnp.sum(p_h[None, :, :] * onehot, axis=1)                          # (K, TB)
        rows.append(lse - pac)                                                   # (K, TB)
    L_flat = jnp.concatenate(rows, axis=0)                                       # (H*K, TB)

    # Score all 120 permutations with a single MXU matmul, pick the best per sample (per lane).
    scores = jnp.dot(perm_ref[...], L_flat, preferred_element_type=jnp.float32)  # (P, TB)
    best = jnp.min(scores, axis=0, keepdims=True)                                # (1, TB)
    out_ref[...] = (best * (1.0 / H))[None]                                      # (1, 1, TB)


def permutation_matching_loss(predictions, targets, *, batch_tile=128):
    """predictions/targets: (B, 5, C). Returns the scalar permutation-matching CE loss."""
    B, H, C = predictions.shape
    assert H == NUM_HEADS, "Number of prediction heads must be 5"
    assert targets.shape == (B, H, C)

    TB = batch_tile                      # sweep up to 512-1024 on v5e/v6e; ~256 on v7x for large C
    num_tiles = pl.cdiv(B, TB)
    B_pad = num_tiles * TB

    # Put the batch on the lane axis: (B, H, C) -> (H, C, B_pad); pad batch to a tile multiple.
    pred_t = jnp.transpose(predictions, (1, 2, 0))
    tgt_t = jnp.transpose(targets, (1, 2, 0))
    if B_pad != B:
        pad = ((0, 0), (0, 0), (0, B_pad - B))
        pred_t = jnp.pad(pred_t, pad)
        tgt_t = jnp.pad(tgt_t, pad)

    P = _perm_matrix()                                                           # (120, 25) f32

    itemsize = jnp.dtype(predictions.dtype).itemsize
    cost = pl.CostEstimate(
        flops=int(B_pad * (6 * H * C + 2 * NUM_PERMS * H * H)),
        transcendentals=int(B_pad * H * (C + 1)),
        bytes_accessed=int(2 * B_pad * H * C * itemsize + NUM_PERMS * H * H * 4 + B_pad * 4),
    )

    per_sample = pl.pallas_call(
        _perm_loss_kernel,
        out_shape=jax.ShapeDtypeStruct((num_tiles, 1, TB), jnp.float32),
        grid_spec=pltpu.PrefetchScalarGridSpec(
            num_scalar_prefetch=0,
            grid=(num_tiles,),
            in_specs=[
                pl.BlockSpec((NUM_PERMS, H * H), lambda i: (0, 0)),
                pl.BlockSpec((H, C, TB), lambda i: (0, 0, i)),
                pl.BlockSpec((H, C, TB), lambda i: (0, 0, i)),
            ],
            out_specs=pl.BlockSpec((1, 1, TB), lambda i: (i, 0, 0)),
        ),
        compiler_params=pltpu.CompilerParams(dimension_semantics=("parallel",)),
        cost_estimate=cost,
    )(P, pred_t, tgt_t)

    # Drop batch padding, then mean over the true batch (sum once / divide once).
    return jnp.mean(per_sample.reshape(-1)[:B])


def _reference_loss(predictions, targets):
    preds = np.asarray(predictions, np.float64)
    tgts = np.asarray(targets, np.float64)
    B, H, C = preds.shape
    perms = list(permutations(range(H)))
    total = 0.0
    for b in range(B):
        mx = preds[b].max(-1, keepdims=True)
        lse = (np.log(np.exp(preds[b] - mx).sum(-1, keepdims=True)) + mx)[:, 0]
        cls = tgts[b].argmax(-1)
        best = np.inf
        for perm in perms:
            loss = np.mean([lse[perm[k]] - preds[b, perm[k], cls[k]] for k in range(H)])
            best = min(best, loss)
        total += best
    return total / B


if __name__ == "__main__":
    key = jax.random.PRNGKey(0)
    k1, k2 = jax.random.split(key)

    B, H, C = 132, 5, 6     # exercises 2 batch tiles (128 + padded remainder)
    predictions = jax.random.normal(k1, (B, H, C), dtype=jnp.float32)
    target_classes = jax.random.randint(k2, (B, H), 0, C)
    targets = jax.nn.one_hot(target_classes, C, dtype=jnp.float32)

    loss = permutation_matching_loss(predictions, targets)
    loss = jax.block_until_ready(loss)

    ref = _reference_loss(predictions, targets)
    assert np.allclose(float(loss), ref, rtol=1e-4, atol=1e-4), (float(loss), ref)

    print("KERNEL_OK")
</pallas_src>

<mosaic_0001>
module attributes {stable_mosaic.version = 11 : i64} {
  func.func @_perm_loss_kernel(%arg0: i32, %arg1: memref<120x25xf32, #tpu.memory_space<vmem>>, %arg2: memref<5x6x128xf32, #tpu.memory_space<vmem>>, %arg3: memref<5x6x128xf32, #tpu.memory_space<vmem>>, %arg4: memref<1x1x128xf32, #tpu.memory_space<vmem>>) attributes {dimension_semantics = [#tpu.dimension_semantics<parallel>], iteration_bounds = array<i64: 2>, scalar_prefetch = 0 : i64, scratch_operands = 0 : i64, tpu.core_type = #tpu.core_type<tc>, window_params = [{pipeline_mode = #tpu.pipeline_mode<synchronous>, transform_indices = @transform_0, window_bounds = array<i64: 120, 25>}, {transform_indices = @transform_1, window_bounds = array<i64: 5, 6, 128>}, {transform_indices = @transform_2, window_bounds = array<i64: 5, 6, 128>}, {transform_indices = @transform_3, window_bounds = array<i64: 1, 1, 128>}]} {
    %c0 = arith.constant 0 : index
    %c0_0 = arith.constant 0 : index
    %c0_1 = arith.constant 0 : index
    %0 = vector.load %arg3[%c0, %c0_0, %c0_1] : memref<5x6x128xf32, #tpu.memory_space<vmem>>, vector<5x6x128xf32>
    %1 = tpu.iota {dimensions = array<i32: 1>} : vector<5x6x128xi32>
    %cst = arith.constant dense<0xFF800000> : vector<5x128xf32>
    %2 = vector.multi_reduction <maximumf>, %0, %cst [1] : vector<5x6x128xf32> to vector<5x128xf32>
    %3 = vector.shape_cast %2 : vector<5x128xf32> to vector<5x1x128xf32>
    %4 = vector.broadcast %3 : vector<5x1x128xf32> to vector<5x6x128xf32>
    %5 = arith.cmpf oeq, %0, %4 : vector<5x6x128xf32>
    %c6_i32 = arith.constant 6 : i32
    %6 = vector.broadcast %c6_i32 : i32 to vector<5x6x128xi32>
    %7 = arith.select %5, %1, %6 : vector<5x6x128xi1>, vector<5x6x128xi32>
    %cst_2 = arith.constant dense<2147483647> : vector<5x128xi32>
    %8 = vector.multi_reduction <minsi>, %7, %cst_2 [1] : vector<5x6x128xi32> to vector<5x128xi32>
    %9 = vector.shape_cast %8 : vector<5x128xi32> to vector<5x1x128xi32>
    %10 = vector.broadcast %9 : vector<5x1x128xi32> to vector<5x6x128xi32>
    %11 = arith.cmpi eq, %1, %10 : vector<5x6x128xi32>
    %12 = arith.extui %11 : vector<5x6x128xi1> to vector<5x6x128xi32>
    %13 = arith.sitofp %12 : vector<5x6x128xi32> to vector<5x6x128xf32>
    %c0_3 = arith.constant 0 : index
    %c0_4 = arith.constant 0 : index
    %c0_5 = arith.constant 0 : index
    %14 = vector.load %arg2[%c0_3, %c0_4, %c0_5] : memref<5x6x128xf32, #tpu.memory_space<vmem>>, vector<1x6x128xf32>
    %15 = vector.shape_cast %14 : vector<1x6x128xf32> to vector<6x128xf32>
    %cst_6 = arith.constant dense<0xFF800000> : vector<128xf32>
    %16 = vector.multi_reduction <maximumf>, %15, %cst_6 [0] : vector<6x128xf32> to vector<128xf32>
    %17 = vector.shape_cast %16 : vector<128xf32> to vector<1x128xf32>
    %18 = vector.broadcast %17 : vector<1x128xf32> to vector<6x128xf32>
    %19 = arith.subf %15, %18 : vector<6x128xf32>
    %20 = math.exp %19 : vector<6x128xf32>
    %cst_7 = arith.constant dense<0.000000e+00> : vector<128xf32>
    %21 = vector.multi_reduction <add>, %20, %cst_7 [0] : vector<6x128xf32> to vector<128xf32>
    %22 = vector.shape_cast %21 : vector<128xf32> to vector<1x128xf32>
    %23 = math.log %22 : vector<1x128xf32>
    %24 = arith.addf %17, %23 : vector<1x128xf32>
    %25 = vector.shape_cast %15 : vector<6x128xf32> to vector<1x6x128xf32>
    %26 = vector.broadcast %25 : vector<1x6x128xf32> to vector<5x6x128xf32>
    %27 = arith.mulf %26, %13 : vector<5x6x128xf32>
    %cst_8 = arith.constant dense<0.000000e+00> : vector<5x128xf32>
    %28 = vector.multi_reduction <add>, %27, %cst_8 [1] : vector<5x6x128xf32> to vector<5x128xf32>
    %29 = vector.broadcast %24 : vector<1x128xf32> to vector<5x128xf32>
    %30 = arith.subf %29, %28 : vector<5x128xf32>
    %c1 = arith.constant 1 : index
    %c0_9 = arith.constant 0 : index
    %c0_10 = arith.constant 0 : index
    %31 = vector.load %arg2[%c1, %c0_9, %c0_10] : memref<5x6x128xf32, #tpu.memory_space<vmem>>, vector<1x6x128xf32>
    %32 = vector.shape_cast %31 : vector<1x6x128xf32> to vector<6x128xf32>
    %cst_11 = arith.constant dense<0xFF800000> : vector<128xf32>
    %33 = vector.multi_reduction <maximumf>, %32, %cst_11 [0] : vector<6x128xf32> to vector<128xf32>
    %34 = vector.shape_cast %33 : vector<128xf32> to vector<1x128xf32>
    %35 = vector.broadcast %34 : vector<1x128xf32> to vector<6x128xf32>
    %36 = arith.subf %32, %35 : vector<6x128xf32>
    %37 = math.exp %36 : vector<6x128xf32>
    %cst_12 = arith.constant dense<0.000000e+00> : vector<128xf32>
    %38 = vector.multi_reduction <add>, %37, %cst_12 [0] : vector<6x128xf32> to vector<128xf32>
    %39 = vector.shape_cast %38 : vector<128xf32> to vector<1x128xf32>
    %40 = math.log %39 : vector<1x128xf32>
    %41 = arith.addf %34, %40 : vector<1x128xf32>
    %42 = vector.shape_cast %32 : vector<6x128xf32> to vector<1x6x128xf32>
    %43 = vector.broadcast %42 : vector<1x6x128xf32> to vector<5x6x128xf32>
    %44 = arith.mulf %43, %13 : vector<5x6x128xf32>
    %cst_13 = arith.constant dense<0.000000e+00> : vector<5x128xf32>
    %45 = vector.multi_reduction <add>, %44, %cst_13 [1] : vector<5x6x128xf32> to vector<5x128xf32>
    %46 = vector.broadcast %41 : vector<1x128xf32> to vector<5x128xf32>
    %47 = arith.subf %46, %45 : vector<5x128xf32>
    %c2 = arith.constant 2 : index
    %c0_14 = arith.constant 0 : index
    %c0_15 = arith.constant 0 : index
    %48 = vector.load %arg2[%c2, %c0_14, %c0_15] : memref<5x6x128xf32, #tpu.memory_space<vmem>>, vector<1x6x128xf32>
    %49 = vector.shape_cast %48 : vector<1x6x128xf32> to vector<6x128xf32>
    %cst_16 = arith.constant dense<0xFF800000> : vector<128xf32>
    %50 = vector.multi_reduction <maximumf>, %49, %cst_16 [0] : vector<6x128xf32> to vector<128xf32>
    %51 = vector.shape_cast %50 : vector<128xf32> to vector<1x128xf32>
    %52 = vector.broadcast %51 : vector<1x128xf32> to vector<6x128xf32>
    %53 = arith.subf %49, %52 : vector<6x128xf32>
    %54 = math.exp %53 : vector<6x128xf32>
    %cst_17 = arith.constant dense<0.000000e+00> : vector<128xf32>
    %55 = vector.multi_reduction <add>, %54, %cst_17 [0] : vector<6x128xf32> to vector<128xf32>
    %56 = vector.shape_cast %55 : vector<128xf32> to vector<1x128xf32>
    %57 = math.log %56 : vector<1x128xf32>
    %58 = arith.addf %51, %57 : vector<1x128xf32>
    %59 = vector.shape_cast %49 : vector<6x128xf32> to vector<1x6x128xf32>
    %60 = vector.broadcast %59 : vector<1x6x128xf32> to vector<5x6x128xf32>
    %61 = arith.mulf %60, %13 : vector<5x6x128xf32>
    %cst_18 = arith.constant dense<0.000000e+00> : vector<5x128xf32>
    %62 = vector.multi_reduction <add>, %61, %cst_18 [1] : vector<5x6x128xf32> to vector<5x128xf32>
    %63 = vector.broadcast %58 : vector<1x128xf32> to vector<5x128xf32>
    %64 = arith.subf %63, %62 : vector<5x128xf32>
    %c3 = arith.constant 3 : index
    %c0_19 = arith.constant 0 : index
    %c0_20 = arith.constant 0 : index
    %65 = vector.load %arg2[%c3, %c0_19, %c0_20] : memref<5x6x128xf32, #tpu.memory_space<vmem>>, vector<1x6x128xf32>
    %66 = vector.shape_cast %65 : vector<1x6x128xf32> to vector<6x128xf32>
    %cst_21 = arith.constant dense<0xFF800000> : vector<128xf32>
    %67 = vector.multi_reduction <maximumf>, %66, %cst_21 [0] : vector<6x128xf32> to vector<128xf32>
    %68 = vector.shape_cast %67 : vector<128xf32> to vector<1x128xf32>
    %69 = vector.broadcast %68 : vector<1x128xf32> to vector<6x128xf32>
    %70 = arith.subf %66, %69 : vector<6x128xf32>
    %71 = math.exp %70 : vector<6x128xf32>
    %cst_22 = arith.constant dense<0.000000e+00> : vector<128xf32>
    %72 = vector.multi_reduction <add>, %71, %cst_22 [0] : vector<6x128xf32> to vector<128xf32>
    %73 = vector.shape_cast %72 : vector<128xf32> to vector<1x128xf32>
    %74 = math.log %73 : vector<1x128xf32>
    %75 = arith.addf %68, %74 : vector<1x128xf32>
    %76 = vector.shape_cast %66 : vector<6x128xf32> to vector<1x6x128xf32>
    %77 = vector.broadcast %76 : vector<1x6x128xf32> to vector<5x6x128xf32>
    %78 = arith.mulf %77, %13 : vector<5x6x128xf32>
    %cst_23 = arith.constant dense<0.000000e+00> : vector<5x128xf32>
    %79 = vector.multi_reduction <add>, %78, %cst_23 [1] : vector<5x6x128xf32> to vector<5x128xf32>
    %80 = vector.broadcast %75 : vector<1x128xf32> to vector<5x128xf32>
    %81 = arith.subf %80, %79 : vector<5x128xf32>
    %c4 = arith.constant 4 : index
    %c0_24 = arith.constant 0 : index
    %c0_25 = arith.constant 0 : index
    %82 = vector.load %arg2[%c4, %c0_24, %c0_25] : memref<5x6x128xf32, #tpu.memory_space<vmem>>, vector<1x6x128xf32>
    %83 = vector.shape_cast %82 : vector<1x6x128xf32> to vector<6x128xf32>
    %cst_26 = arith.constant dense<0xFF800000> : vector<128xf32>
    %84 = vector.multi_reduction <maximumf>, %83, %cst_26 [0] : vector<6x128xf32> to vector<128xf32>
    %85 = vector.shape_cast %84 : vector<128xf32> to vector<1x128xf32>
    %86 = vector.broadcast %85 : vector<1x128xf32> to vector<6x128xf32>
    %87 = arith.subf %83, %86 : vector<6x128xf32>
    %88 = math.exp %87 : vector<6x128xf32>
    %cst_27 = arith.constant dense<0.000000e+00> : vector<128xf32>
    %89 = vector.multi_reduction <add>, %88, %cst_27 [0] : vector<6x128xf32> to vector<128xf32>
    %90 = vector.shape_cast %89 : vector<128xf32> to vector<1x128xf32>
    %91 = math.log %90 : vector<1x128xf32>
    %92 = arith.addf %85, %91 : vector<1x128xf32>
    %93 = vector.shape_cast %83 : vector<6x128xf32> to vector<1x6x128xf32>
    %94 = vector.broadcast %93 : vector<1x6x128xf32> to vector<5x6x128xf32>
    %95 = arith.mulf %94, %13 : vector<5x6x128xf32>
    %cst_28 = arith.constant dense<0.000000e+00> : vector<5x128xf32>
    %96 = vector.multi_reduction <add>, %95, %cst_28 [1] : vector<5x6x128xf32> to vector<5x128xf32>
    %97 = vector.broadcast %92 : vector<1x128xf32> to vector<5x128xf32>
    %98 = arith.subf %97, %96 : vector<5x128xf32>
    %99 = tpu.concatenate %30, %47, %64, %81, %98 in 0 : vector<5x128xf32>, vector<5x128xf32>, vector<5x128xf32>, vector<5x128xf32>, vector<5x128xf32> -> vector<25x128xf32>
    %c0_29 = arith.constant 0 : index
    %c0_30 = arith.constant 0 : index
    %100 = vector.load %arg1[%c0_29, %c0_30] : memref<120x25xf32, #tpu.memory_space<vmem>>, vector<120x25xf32>
    %cst_31 = arith.constant dense<0.000000e+00> : vector<120x128xf32>
    %101 = tpu.matmul %100, %99, %cst_31 {dimension_numbers = #tpu.dot_dimension_numbers<[1], [0], [0], [1], [0, 0, 1, 1], [], []>} : vector<120x25xf32>, vector<25x128xf32>, vector<120x128xf32> -> vector<120x128xf32>
    %cst_32 = arith.constant dense<0x7F800000> : vector<128xf32>
    %102 = vector.multi_reduction <minimumf>, %101, %cst_32 [0] : vector<120x128xf32> to vector<128xf32>
    %103 = vector.shape_cast %102 : vector<128xf32> to vector<1x128xf32>
    %cst_33 = arith.constant 2.000000e-01 : f32
    %104 = vector.broadcast %cst_33 : f32 to vector<1x128xf32>
    %105 = arith.mulf %103, %104 : vector<1x128xf32>
    %106 = vector.shape_cast %105 : vector<1x128xf32> to vector<1x1x128xf32>
    %c0_34 = arith.constant 0 : index
    %c0_35 = arith.constant 0 : index
    %c0_36 = arith.constant 0 : index
    %107 = vector.load %arg4[%c0_34, %c0_35, %c0_36] : memref<1x1x128xf32, #tpu.memory_space<vmem>>, vector<1x1x128xf32>
    tpu.vector_store %arg4[%c0_34, %c0_35, %c0_36], %106 {strides = array<i32>} : memref<1x1x128xf32, #tpu.memory_space<vmem>>, vector<1x1x128xf32>,
    return
  }
  func.func @transform_0(%arg0: i32) -> (i32, i32) {
    %c0_i32 = arith.constant 0 : i32
    %c0_i32_0 = arith.constant 0 : i32
    %c0_i32_1 = arith.constant 0 : i32
    return %c0_i32, %c0_i32_0 : i32, i32
  }
  func.func @transform_1(%arg0: i32) -> (i32, i32, i32) {
    %c0_i32 = arith.constant 0 : i32
    %c0_i32_0 = arith.constant 0 : i32
    %c0_i32_1 = arith.constant 0 : i32
    return %c0_i32, %c0_i32_0, %arg0 : i32, i32, i32
  }
  func.func @transform_2(%arg0: i32) -> (i32, i32, i32) {
    %c0_i32 = arith.constant 0 : i32
    %c0_i32_0 = arith.constant 0 : i32
    %c0_i32_1 = arith.constant 0 : i32
    return %c0_i32, %c0_i32_0, %arg0 : i32, i32, i32
  }
  func.func @transform_3(%arg0: i32) -> (i32, i32, i32) {
    %c0_i32 = arith.constant 0 : i32
    %c0_i32_0 = arith.constant 0 : i32
    %c0_i32_1 = arith.constant 0 : i32
    return %arg0, %c0_i32, %c0_i32_0 : i32, i32, i32
  }
}

</mosaic_0001>

<llo_original>
// kernel: tpu_custom_call.1
$region0: #{tpu_custom_call.1}
  #allocation0 [shape = 'u32[]', space=smem, size = 0x4, offset = 0x4, fixed_abs, tag = 'smem constant byte address 0x4 - core index']
  #allocation1 [shape = 'u32[144,128]{1,0:T(1,128)}', space=vmem, size = 0x12000, scoped, tag = 'internal scratch']
  %s0 = inlined_call_operand.vmem [shape: f32[120,25], index: 0, kind: input, shape index: {}]
  %s1 = inlined_call_operand.vmem [shape: f32[5,6,256], index: 1, kind: input, shape index: {}]
  %s2 = inlined_call_operand.hbm [shape: f32[5,6,256], index: 2, kind: input, shape index: {}]
  %s3 = inlined_call_operand.hbm [shape: f32[2,1,128], index: 3, kind: output, shape index: {}]
  %s4 = sld [smem:[#allocation0]]
  $region87: #{tpu_custom_call.1} parent=0
    _
  %s6 = ssub.s32 1, %s4
  %s7 = scalar_select 0, %s6, %s4
  $region1: #{tpu_custom_call.1} parent=0
    #allocation2 [shape = 'u8[40960]{0}', space=vmem, size = 0xa000, scoped, tag = 'input window, operand 1']
    #allocation3 [shape = 'u8[40960]{0}', space=vmem, size = 0xa000, scoped, tag = 'input window, operand 2']
    #allocation4 [shape = 's32[2]{0}', space=sflag, size = 0x8, scoped, tag = 'scoped memory for tpu_custom_call.1']
    #allocation5 [shape = 's32[2]{0}', space=sflag, size = 0x8, scoped, tag = 'scoped memory for tpu_custom_call.1']
    #allocation6 [shape = 'u8[1024]{0}', space=vmem, size = 0x400, scoped, tag = 'output window, operand 0']
    %8 = vsyncpa [#allocation4], 0
    %s9 = scalar_lea.sflag [#allocation4], 1
    %10 = vsyncpa %s9, 0
    %11 = vsyncpa [#allocation5], 0
    %s12 = scalar_lea.sflag [#allocation5], 1
    %13 = vsyncpa %s12, 0
    loop: start=0, step=1, limit=4
    $region2: #{tpu_custom_call.1} parent=1 // loop_pre_header
      _
    $region3: #{tpu_custom_call.1} parent=1 // loop_header
      %s15 = sphi 0, %s19
      %p16 = scmp.ge.s32.totalorder %s15, 4
      %s23 = sphi 0, %s23
      %s25 = sphi 0, %s23
      %s26 = sphi 0, %s25
      %s40 = sphi 0, %s26
      %s46 = sphi 0, %s48
      %s49 = sphi 0, %s46
      %s50 = sphi 0, %s49
      %s66 = sphi 0, %s50
      %s72 = sphi 0, %s74
      %s75 = sphi 0, %s72
      %s76 = sphi 0, %s75
      %s92 = sphi 0, %s76
      %s98 = sphi 0, %s100
      %s101 = sphi 0, %s98
      %s102 = sphi 0, %s101
      %s118 = sphi 0, %s102
    $region4: #{tpu_custom_call.1} parent=1 // loop_header_branch
      %18 = sbr.rel (%p16) target = $region8
    $region5: #{tpu_custom_call.1} parent=1 // loop_body
      %s20 = ssub.s32 %s15, 1
      %s21 = ssub.s32 %s15, 2
      %s22 = sadd.s32 %s15, 1
      %s24 = sadd.s32 %s23, 1
      %p27 = scmp.eq.s32.totalorder %s15, 1
      %p28 = scmp.ne.s32.totalorder %s23, %s25
      %p29 = scmp.eq.s32.totalorder %s15, 0
      %p30 = por %p28, %p29
      %p31 = scmp.ne.s32.totalorder %s23, %s25
      %p32 = scmp.eq.s32.totalorder %s20, 1
      %p33 = por %p31, %p32
      %p34 = scmp.ne.s32.totalorder %s25, %s26
      %p35 = scmp.eq.s32.totalorder %s20, 0
      %p36 = por %p34, %p35
      %p37 = scmp.ne.s32.totalorder %s25, %s26
      %p38 = scmp.eq.s32.totalorder %s21, 1
      %p39 = por %p37, %p38
      %p41 = scmp.ne.s32.totalorder %s26, %s40
      %p42 = scmp.eq.s32.totalorder %s21, 0
      %p43 = por %p41, %p42
      %s44 = ssub.s32 %s15, %s22
      %p45 = scmp.eq.s32.totalorder %s44, 0
      %s47 = sadd.s32 %s46, 1
      %s48 = scalar_select %p45, %s46, %s47
      %p51 = pneg %p45
      %p52 = scmp.eq.s32.totalorder %s15, 1
      %p53 = por %p51, %p52
      %p54 = scmp.ne.s32.totalorder %s46, %s49
      %p55 = scmp.eq.s32.totalorder %s15, 0
      %p56 = por %p54, %p55
      %p57 = scmp.ne.s32.totalorder %s46, %s49
      %p58 = scmp.eq.s32.totalorder %s20, 1
      %p59 = por %p57, %p58
      %p60 = scmp.ne.s32.totalorder %s49, %s50
      %p61 = scmp.eq.s32.totalorder %s20, 0
      %p62 = por %p60, %p61
      %p63 = scmp.ne.s32.totalorder %s49, %s50
      %p64 = scmp.eq.s32.totalorder %s21, 1
      %p65 = por %p63, %p64
      %p67 = scmp.ne.s32.totalorder %s50, %s66
      %p68 = scmp.eq.s32.totalorder %s21, 0
      %p69 = por %p67, %p68
      %s70 = ssub.s32 %s15, %s22
      %p71 = scmp.eq.s32.totalorder %s70, 0
      %s73 = sadd.s32 %s72, 1
      %s74 = scalar_select %p71, %s72, %s73
      %p77 = pneg %p71
      %p78 = scmp.eq.s32.totalorder %s15, 1
      %p79 = por %p77, %p78
      %p80 = scmp.ne.s32.totalorder %s72, %s75
      %p81 = scmp.eq.s32.totalorder %s15, 0
      %p82 = por %p80, %p81
      %p83 = scmp.ne.s32.totalorder %s72, %s75
      %p84 = scmp.eq.s32.totalorder %s20, 1
      %p85 = por %p83, %p84
      %p86 = scmp.ne.s32.totalorder %s75, %s76
      %p87 = scmp.eq.s32.totalorder %s20, 0
      %p88 = por %p86, %p87
      %p89 = scmp.ne.s32.totalorder %s75, %s76
      %p90 = scmp.eq.s32.totalorder %s21, 1
      %p91 = por %p89, %p90
      %p93 = scmp.ne.s32.totalorder %s76, %s92
      %p94 = scmp.eq.s32.totalorder %s21, 0
      %p95 = por %p93, %p94
      %s96 = ssub.s32 %s15, %s22
      %p97 = scmp.eq.s32.totalorder %s96, 0
      %s99 = sadd.s32 %s98, 1
      %s100 = scalar_select %p97, %s98, %s99
      %p103 = pneg %p97
      %p104 = scmp.eq.s32.totalorder %s15, 1
      %p105 = por %p103, %p104
      %p106 = scmp.ne.s32.totalorder %s98, %s101
      %p107 = scmp.eq.s32.totalorder %s15, 0
      %p108 = por %p106, %p107
      %p109 = scmp.ne.s32.totalorder %s98, %s101
      %p110 = scmp.eq.s32.totalorder %s20, 1
      %p111 = por %p109, %p110
      %p112 = scmp.ne.s32.totalorder %s101, %s102
      %p113 = scmp.eq.s32.totalorder %s20, 0
      %p114 = por %p112, %p113
      %p115 = scmp.ne.s32.totalorder %s101, %s102
      %p116 = scmp.eq.s32.totalorder %s21, 1
      %p117 = por %p115, %p116
      %p119 = scmp.ne.s32.totalorder %s102, %s118
      %p120 = scmp.eq.s32.totalorder %s21, 0
      %p121 = por %p119, %p120
      %p122 = scmp.le.s32.totalorder 1, %s15
      %p123 = scmp.lt.s32.totalorder %s15, 3
      %p124 = pnand %p122, %p123
      %p125 = pneg %p124
      // Predicated region
      $region9: #{tpu_custom_call.1} parent=5 // pred_check
        _
      $region10: #{tpu_custom_call.1} parent=5 // pred_check_branch
        %127 = sbr.rel (%p124) target = $region12
      $region11: #{tpu_custom_call.1} parent=5 // pred_region
        %s128 = ssub.s32 %s15, 1
        // Predicated region
        $region13: #{tpu_custom_call.1} parent=11 // pred_check
          %p129 = pneg %p36
        $region14: #{tpu_custom_call.1} parent=11 // pred_check_branch
          %131 = sbr.rel (%p129) target = $region16
        $region15: #{tpu_custom_call.1} parent=11 // pred_region
          _
        $region16: #{tpu_custom_call.1} parent=11 // pred_fallthru
          _
      $region12: #{tpu_custom_call.1} parent=5 // pred_fallthru
        _
      %p132 = scmp.lt.s32.totalorder %s15, 2
      // Predicated region
      $region17: #{tpu_custom_call.1} parent=5 // pred_check
        %p133 = pneg %p132
      $region18: #{tpu_custom_call.1} parent=5 // pred_check_branch
        %135 = sbr.rel (%p133) target = $region20
      $region19: #{tpu_custom_call.1} parent=5 // pred_region
        // Predicated region
        $region21: #{tpu_custom_call.1} parent=19 // pred_check
          %p136 = pneg %p56
        $region22: #{tpu_custom_call.1} parent=19 // pred_check_branch
          %138 = sbr.rel (%p136) target = $region24
        $region23: #{tpu_custom_call.1} parent=19 // pred_region
          %s139 = sand.u32 %s46, 1
          %s140 = sand.u32 %s46, 1
          %s141 = smul.addr %s140, 40
          %s142 = scalar_lea.vmem [#allocation2], %s141
          %s143 = smul.addr %s15, 8
          %s144 = scalar_lea.vmem %s1, %s143
          // Predicated region
          $region25: #{tpu_custom_call.1} parent=23 // pred_check
            _
          $region26: #{tpu_custom_call.1} parent=23 // pred_check_branch
            %146 = sbr.rel (0) target = $region28
          $region27: #{tpu_custom_call.1} parent=23 // pred_region
            // Predicated region
            $region29: #{tpu_custom_call.1} parent=27 // pred_check
              _
            $region30: #{tpu_custom_call.1} parent=27 // pred_check_branch
              %148 = sbr.rel (0) target = $region32
            $region31: #{tpu_custom_call.1} parent=27 // pred_region
              // Predicated region
              $region44: #{tpu_custom_call.1} parent=31 // pred_check
                _
              $region45: #{tpu_custom_call.1} parent=31 // pred_check_branch
                %172 = sbr.rel (0) target = $region47
              $region46: #{tpu_custom_call.1} parent=31 // pred_region
                loop: start=0, step=1, limit=1
                $region48: #{tpu_custom_call.1} parent=46 // loop_pre_header
                  _
                $region49: #{tpu_custom_call.1} parent=46 // loop_header
                  %s174 = sphi 0, %s178
                  %p175 = scmp.ge.s32.totalorder %s174, 1
                  %s179 = sphi %s144, %s144
                  %s180 = sphi %s142, %s142
                $region50: #{tpu_custom_call.1} parent=46 // loop_header_branch
                  %177 = sbr.rel (%p175) target = $region54
                $region51: #{tpu_custom_call.1} parent=46 // loop_body
                  %v181 = vld [vmem:[%s179] sm:$0xff]
                  %182 = vst [vmem:[%s180] sm:$0xff] %v181
                  %v183 = vld [vmem:[%s179 + $0x10] sm:$0xff]
                  %184 = vst [vmem:[%s180 + $0x8] sm:$0xff] %v183
                  %v185 = vld [vmem:[%s179 + $0x20] sm:$0xff]
                  %186 = vst [vmem:[%s180 + $0x10] sm:$0xff] %v185
                  %v187 = vld [vmem:[%s179 + $0x30] sm:$0xff]
                  %188 = vst [vmem:[%s180 + $0x18] sm:$0xff] %v187
                  %v189 = vld [vmem:[%s179 + $0x40] sm:$0xff]
                  %190 = vst [vmem:[%s180 + $0x20] sm:$0xff] %v189
                $region52: #{tpu_custom_call.1} parent=46 // loop_footer
                  %s178 = sadd.s32 1, %s174
                $region53: #{tpu_custom_call.1} parent=46 // loop_footer_branch
                  %173 = sbr.rel target = $region49
                $region54: #{tpu_custom_call.1} parent=46 // loop_exit
                  _
              $region47: #{tpu_custom_call.1} parent=31 // pred_fallthru
                _
              // Predicated region
              $region55: #{tpu_custom_call.1} parent=31 // pred_check
                _
              $region56: #{tpu_custom_call.1} parent=31 // pred_check_branch
                %192 = sbr.rel target = $region58
              $region57: #{tpu_custom_call.1} parent=31 // pred_region
                _
              $region58: #{tpu_custom_call.1} parent=31 // pred_fallthru
                _
            $region32: #{tpu_custom_call.1} parent=27 // pred_fallthru
              _
            // Predicated region
            $region33: #{tpu_custom_call.1} parent=27 // pred_check
              _
            $region34: #{tpu_custom_call.1} parent=27 // pred_check_branch
              %150 = sbr.rel target = $region36
            $region35: #{tpu_custom_call.1} parent=27 // pred_region
              %s152 = ssub.s32 256, 1
              loop: start=0, step=1, limit=1
              $region37: #{tpu_custom_call.1} parent=35 // loop_pre_header
                _
              $region38: #{tpu_custom_call.1} parent=35 // loop_header
                %s154 = sphi 0, %s158
                %p155 = scmp.ge.s32.totalorder %s154, 1
                %s159 = sphi %s144, %s144
                %s160 = sphi %s142, %s142
              $region39: #{tpu_custom_call.1} parent=35 // loop_header_branch
                %157 = sbr.rel (%p155) target = $region43
              $region40: #{tpu_custom_call.1} parent=35 // loop_body
                %v161 = vld [vmem:[%s159] sm:%s152]
                %162 = vst [vmem:[%s160] sm:%s152] %v161
                %v163 = vld [vmem:[%s159 + $0x10] sm:%s152]
                %164 = vst [vmem:[%s160 + $0x8] sm:%s152] %v163
                %v165 = vld [vmem:[%s159 + $0x20] sm:%s152]
                %166 = vst [vmem:[%s160 + $0x10] sm:%s152] %v165
                %v167 = vld [vmem:[%s159 + $0x30] sm:%s152]
                %168 = vst [vmem:[%s160 + $0x18] sm:%s152] %v167
                %v169 = vld [vmem:[%s159 + $0x40] sm:%s152]
                %170 = vst [vmem:[%s160 + $0x20] sm:%s152] %v169
              $region41: #{tpu_custom_call.1} parent=35 // loop_footer
                %s158 = sadd.s32 1, %s154
              $region42: #{tpu_custom_call.1} parent=35 // loop_footer_branch
                %153 = sbr.rel target = $region38
              $region43: #{tpu_custom_call.1} parent=35 // loop_exit
                _
            $region36: #{tpu_custom_call.1} parent=27 // pred_fallthru
              _
          $region28: #{tpu_custom_call.1} parent=23 // pred_fallthru
            _
          %193 = vnop
        $region24: #{tpu_custom_call.1} parent=19 // pred_fallthru
          _
        // Predicated region
        $region59: #{tpu_custom_call.1} parent=19 // pred_check
          %p194 = pneg %p82
        $region60: #{tpu_custom_call.1} parent=19 // pred_check_branch
          %196 = sbr.rel (%p194) target = $region62
        $region61: #{tpu_custom_call.1} parent=19 // pred_region
          %s197 = sand.u32 %s72, 1
          %s198 = scalar_lea.sflag [#allocation4], %s197
          %s199 = sand.u32 %s72, 1
          %s200 = smul.addr %s199, 40
          %s201 = scalar_lea.vmem [#allocation3], %s200
          %s203 = ssub.s32 640, 640
          %204 = vsyncadd %s198, %s203
          %s205 = smul.addr %s15, 128
          %s206 = scalar_lea.hbm %s2, %s205
          %s207 = sshll.u32 %s201, 4
          %s208 = int_to_ptr.vmem [resolvable:$true] %s207
          %213 = dma.hbm_to_vmem [thread:$0]  %s206, 640, %s208, %s198, 256, 128, 8
        $region62: #{tpu_custom_call.1} parent=19 // pred_fallthru
          _
      $region20: #{tpu_custom_call.1} parent=5 // pred_fallthru
        _
      %p214 = scmp.le.s32.totalorder 1, %s15
      %p215 = scmp.lt.s32.totalorder %s15, 3
      %p216 = pnand %p214, %p215
      %p217 = pneg %p216
      // Predicated region
      $region63: #{tpu_custom_call.1} parent=5 // pred_check
        _
      $region64: #{tpu_custom_call.1} parent=5 // pred_check_branch
        %219 = sbr.rel (%p216) target = $region66
      $region65: #{tpu_custom_call.1} parent=5 // pred_region
        %s220 = ssub.s32 %s15, 1
        %s221 = sand.u32 %s49, 1
        %s222 = sand.u32 %s49, 1
        %s223 = smul.addr %s222, 40
        %s224 = scalar_lea.vmem [#allocation2], %s223
        // Predicated region
        $region67: #{tpu_custom_call.1} parent=65 // pred_check
          %p225 = pneg %p62
        $region68: #{tpu_custom_call.1} parent=65 // pred_check_branch
          %227 = sbr.rel (%p225) target = $region70
        $region69: #{tpu_custom_call.1} parent=65 // pred_region
          _
        $region70: #{tpu_custom_call.1} parent=65 // pred_fallthru
          _
        %s228 = sand.u32 %s75, 1
        %s229 = scalar_lea.sflag [#allocation4], %s228
        %s230 = sand.u32 %s75, 1
        %s231 = smul.addr %s230, 40
        %s232 = scalar_lea.vmem [#allocation3], %s231
        // Predicated region
        $region71: #{tpu_custom_call.1} parent=65 // pred_check
          %p233 = pneg %p88
        $region72: #{tpu_custom_call.1} parent=65 // pred_check_branch
          %235 = sbr.rel (%p233) target = $region74
        $region73: #{tpu_custom_call.1} parent=65 // pred_region
          %236 = dma.done %s229, 640
        $region74: #{tpu_custom_call.1} parent=65 // pred_fallthru
          _
        %p237 = pneg %p36
        %p238 = pneg %p33
        %s239 = sand.u32 %s49, 1
        %s240 = sand.u32 %s49, 1
        %s241 = smul.addr %s240, 40
        %s242 = scalar_lea.vmem [#allocation2], %s241
        %p243 = pneg %p62
        %p244 = pneg %p59
        %s245 = sand.u32 %s75, 1
        %s246 = scalar_lea.sflag [#allocation4], %s245
        %s247 = sand.u32 %s75, 1
        %s248 = smul.addr %s247, 40
        %s249 = scalar_lea.vmem [#allocation3], %s248
        %p250 = pneg %p88
        %p251 = pneg %p85
        %p252 = pneg %p114
        %p253 = pneg %p111
        %s254 = sand.u32 %s101, 1
        %s255 = scalar_lea.sflag [#allocation5], %s254
        %s256 = sand.u32 %s101, 1
        %s257 = scalar_lea.vmem [#allocation6], %s256
        %v258 = vld [vmem:[%s232] sm:$0x3f]
        %v259 = vld [vmem:[%s232 + $0x8] sm:$0x3f]
        %v260 = vld [vmem:[%s232 + $0x10] sm:$0x3f]
        %v261 = vld [vmem:[%s232 + $0x18] sm:$0x3f]
        %v262 = vld [vmem:[%s232 + $0x20] sm:$0x3f]
        %v263 = vlaneseq
        %v264 = vshrl.u32 %v263, 7
        %vm265 = vcmask 1045504
        %v266 = vsel %vm265, %v258, -inf
        %v267 = vrot.slane %v266, 4
        %v268 = vmax.f32 %v266, %v267
        %v269 = vrot.slane %v268, 2
        %v270 = vmax.f32 %v268, %v269
        %v271 = vrot.slane %v270, 1
        %v272 = vmax.f32 %v270, %v271
        %v273 = vsel %vm265, %v259, -inf
        %v274 = vrot.slane %v273, 4
        %v275 = vmax.f32 %v273, %v274
        %v276 = vrot.slane %v275, 2
        %v277 = vmax.f32 %v275, %v276
        %v278 = vrot.slane %v277, 1
        %v279 = vmax.f32 %v277, %v278
        %v280 = vsel %vm265, %v260, -inf
        %v281 = vrot.slane %v280, 4
        %v282 = vmax.f32 %v280, %v281
        %v283 = vrot.slane %v282, 2
        %v284 = vmax.f32 %v282, %v283
        %v285 = vrot.slane %v284, 1
        %v286 = vmax.f32 %v284, %v285
        %v287 = vsel %vm265, %v261, -inf
        %v288 = vrot.slane %v287, 4
        %v289 = vmax.f32 %v287, %v288
        %v290 = vrot.slane %v289, 2
        %v291 = vmax.f32 %v289, %v290
        %v292 = vrot.slane %v291, 1
        %v293 = vmax.f32 %v291, %v292
        %v294 = vsel %vm265, %v262, -inf
        %v295 = vrot.slane %v294, 4
        %v296 = vmax.f32 %v294, %v295
        %v297 = vrot.slane %v296, 2
        %v298 = vmax.f32 %v296, %v297
        %v299 = vrot.slane %v298, 1
        %v300 = vmax.f32 %v298, %v299
        %vm301 = vcmp.eq.f32.partialorder %v258, %v272
        %vm302 = vcmp.eq.f32.partialorder %v259, %v279
        %vm303 = vcmp.eq.f32.partialorder %v260, %v286
        %vm304 = vcmp.eq.f32.partialorder %v261, %v293
        %vm305 = vcmp.eq.f32.partialorder %v262, %v300
        %v306 = vsel %vm301, %v264, 6
        %v307 = vsel %vm302, %v264, 6
        %v308 = vsel %vm303, %v264, 6
        %v309 = vsel %vm304, %v264, 6
        %v310 = vsel %vm305, %v264, 6
        %v311 = vsel %vm265, %v306, 2147483647
        %v312 = vrot.slane %v311, 4
        %vm313 = vcmp.lt.s32.totalorder %v311, %v312
        %v314 = vsel %vm313, %v311, %v312
        %v315 = vrot.slane %v314, 2
        %vm316 = vcmp.lt.s32.totalorder %v314, %v315
        %v317 = vsel %vm316, %v314, %v315
        %v318 = vrot.slane %v317, 1
        %vm319 = vcmp.lt.s32.totalorder %v317, %v318
        %v320 = vsel %vm319, %v317, %v318
        %v321 = vsel %vm265, %v307, 2147483647
        %v322 = vrot.slane %v321, 4
        %vm323 = vcmp.lt.s32.totalorder %v321, %v322
        %v324 = vsel %vm323, %v321, %v322
        %v325 = vrot.slane %v324, 2
        %vm326 = vcmp.lt.s32.totalorder %v324, %v325
        %v327 = vsel %vm326, %v324, %v325
        %v328 = vrot.slane %v327, 1
        %vm329 = vcmp.lt.s32.totalorder %v327, %v328
        %v330 = vsel %vm329, %v327, %v328
        %v331 = vsel %vm265, %v308, 2147483647
        %v332 = vrot.slane %v331, 4
        %vm333 = vcmp.lt.s32.totalorder %v331, %v332
        %v334 = vsel %vm333, %v331, %v332
        %v335 = vrot.slane %v334, 2
        %vm336 = vcmp.lt.s32.totalorder %v334, %v335
        %v337 = vsel %vm336, %v334, %v335
        %v338 = vrot.slane %v337, 1
        %vm339 = vcmp.lt.s32.totalorder %v337, %v338
        %v340 = vsel %vm339, %v337, %v338
        %v341 = vsel %vm265, %v309, 2147483647
        %v342 = vrot.slane %v341, 4
        %vm343 = vcmp.lt.s32.totalorder %v341, %v342
        %v344 = vsel %vm343, %v341, %v342
        %v345 = vrot.slane %v344, 2
        %vm346 = vcmp.lt.s32.totalorder %v344, %v345
        %v347 = vsel %vm346, %v344, %v345
        %v348 = vrot.slane %v347, 1
        %vm349 = vcmp.lt.s32.totalorder %v347, %v348
        %v350 = vsel %vm349, %v347, %v348
        %v351 = vsel %vm265, %v310, 2147483647
        %v352 = vrot.slane %v351, 4
        %vm353 = vcmp.lt.s32.totalorder %v351, %v352
        %v354 = vsel %vm353, %v351, %v352
        %v355 = vrot.slane %v354, 2
        %vm356 = vcmp.lt.s32.totalorder %v354, %v355
        %v357 = vsel %vm356, %v354, %v355
        %v358 = vrot.slane %v357, 1
        %vm359 = vcmp.lt.s32.totalorder %v357, %v358
        %v360 = vsel %vm359, %v357, %v358
        %vm361 = vcmp.eq.s32.totalorder %v264, %v320
        %vm362 = vcmp.eq.s32.totalorder %v264, %v330
        %vm363 = vcmp.eq.s32.totalorder %v264, %v340
        %vm364 = vcmp.eq.s32.totalorder %v264, %v350
        %vm365 = vcmp.eq.s32.totalorder %v264, %v360
        %v366 = vsel %vm361, 1, 0
        %v367 = vsel %vm362, 1, 0
        %v368 = vsel %vm363, 1, 0
        %v369 = vsel %vm364, 1, 0
        %v370 = vsel %vm365, 1, 0
        %v371 = vcvt.s32.f32 %v366
        %v372 = vcvt.s32.f32 %v367
        %v373 = vcvt.s32.f32 %v368
        %v374 = vcvt.s32.f32 %v369
        %v375 = vcvt.s32.f32 %v370
        %v376 = vld [vmem:[%s224] sm:$0x3f]
        %v377 = vsel %vm265, %v376, -inf
        %v378 = vrot.slane %v377, 4
        %v379 = vmax.f32 %v377, %v378
        %v380 = vrot.slane %v379, 2
        %v381 = vmax.f32 %v379, %v380
        %v382 = vrot.slane %v381, 1
        %v383 = vmax.f32 %v381, %v382
        %v384 = vsub.f32 %v376, %v383
        %v385 = vmul.f32 %v384, 1.442695
        %v386 = vpow.pop %v385
        %v387 = vsel %vm265, %v386, 0.0
        %v388 = vrot.slane %v387, 4
        %v389 = vadd.f32 %v387, %v388
        %v390 = vrot.slane %v389, 2
        %v391 = vadd.f32 %v389, %v390
        %v392 = vrot.slane %v391, 1
        %v393 = vadd.f32 %v391, %v392
        %v394 = vlog2.pop %v393
        %v395 = vmul.f32 %v394, 0.6931472
        %v396 = vadd.f32 %v383, %v395
        %v397 = vmul.f32 %v376, %v371
        %v398 = vmul.f32 %v376, %v372
        %v399 = vmul.f32 %v376, %v373
        %v400 = vmul.f32 %v376, %v374
        %v401 = vmul.f32 %v376, %v375
        %v402 = vsel %vm265, %v397, 0.0
        %v403 = vrot.slane %v402, 4
        %v404 = vadd.f32 %v402, %v403
        %v405 = vrot.slane %v404, 2
        %v406 = vadd.f32 %v404, %v405
        %v407 = vrot.slane %v406, 1
        %v408 = vadd.f32 %v406, %v407
        %v409 = vsel %vm265, %v398, 0.0
        %v410 = vrot.slane %v409, 4
        %v411 = vadd.f32 %v409, %v410
        %v412 = vrot.slane %v411, 2
        %v413 = vadd.f32 %v411, %v412
        %v414 = vrot.slane %v413, 1
        %v415 = vadd.f32 %v413, %v414
        %v416 = vsel %vm265, %v399, 0.0
        %v417 = vrot.slane %v416, 4
        %v418 = vadd.f32 %v416, %v417
        %v419 = vrot.slane %v418, 2
        %v420 = vadd.f32 %v418, %v419
        %v421 = vrot.slane %v420, 1
        %v422 = vadd.f32 %v420, %v421
        %v423 = vsel %vm265, %v400, 0.0
        %v424 = vrot.slane %v423, 4
        %v425 = vadd.f32 %v423, %v424
        %v426 = vrot.slane %v425, 2
        %v427 = vadd.f32 %v425, %v426
        %v428 = vrot.slane %v427, 1
        %v429 = vadd.f32 %v427, %v428
        %v430 = vsel %vm265, %v401, 0.0
        %v431 = vrot.slane %v430, 4
        %v432 = vadd.f32 %v430, %v431
        %v433 = vrot.slane %v432, 2
        %v434 = vadd.f32 %v432, %v433
        %v435 = vrot.slane %v434, 1
        %v436 = vadd.f32 %v434, %v435
        %vm442 = vcmask 1041409
        %v443 = vsel %vm442, %v415, %v408
        %vm444 = vcmask 1042434
        %v445 = vsel %vm444, %v422, %v443
        %vm446 = vcmask 1043459
        %v447 = vsel %vm446, %v429, %v445
        %vm448 = vcmask 1044484
        %v449 = vsel %vm448, %v436, %v447
        %v451 = vsub.f32 %v396, %v449
        %s452 = scalar_lea.vmem %s224, 8 [#allocation2]
        %v453 = vld [vmem:[%s452] sm:$0x3f]
        %v454 = vsel %vm265, %v453, -inf
        %v455 = vrot.slane %v454, 4
        %v456 = vmax.f32 %v454, %v455
        %v457 = vrot.slane %v456, 2
        %v458 = vmax.f32 %v456, %v457
        %v459 = vrot.slane %v458, 1
        %v460 = vmax.f32 %v458, %v459
        %v461 = vsub.f32 %v453, %v460
        %v462 = vmul.f32 %v461, 1.442695
        %v463 = vpow.pop %v462
        %v464 = vsel %vm265, %v463, 0.0
        %v465 = vrot.slane %v464, 4
        %v466 = vadd.f32 %v464, %v465
        %v467 = vrot.slane %v466, 2
        %v468 = vadd.f32 %v466, %v467
        %v469 = vrot.slane %v468, 1
        %v470 = vadd.f32 %v468, %v469
        %v471 = vlog2.pop %v470
        %v472 = vmul.f32 %v471, 0.6931472
        %v473 = vadd.f32 %v460, %v472
        %v474 = vmul.f32 %v453, %v371
        %v475 = vmul.f32 %v453, %v372
        %v476 = vmul.f32 %v453, %v373
        %v477 = vmul.f32 %v453, %v374
        %v478 = vmul.f32 %v453, %v375
        %v479 = vsel %vm265, %v474, 0.0
        %v480 = vrot.slane %v479, 4
        %v481 = vadd.f32 %v479, %v480
        %v482 = vrot.slane %v481, 2
        %v483 = vadd.f32 %v481, %v482
        %v484 = vrot.slane %v483, 1
        %v485 = vadd.f32 %v483, %v484
        %v486 = vsel %vm265, %v475, 0.0
        %v487 = vrot.slane %v486, 4
        %v488 = vadd.f32 %v486, %v487
        %v489 = vrot.slane %v488, 2
        %v490 = vadd.f32 %v488, %v489
        %v491 = vrot.slane %v490, 1
        %v492 = vadd.f32 %v490, %v491
        %v493 = vsel %vm265, %v476, 0.0
        %v494 = vrot.slane %v493, 4
        %v495 = vadd.f32 %v493, %v494
        %v496 = vrot.slane %v495, 2
        %v497 = vadd.f32 %v495, %v496
        %v498 = vrot.slane %v497, 1
        %v499 = vadd.f32 %v497, %v498
        %v500 = vsel %vm265, %v477, 0.0
        %v501 = vrot.slane %v500, 4
        %v502 = vadd.f32 %v500, %v501
        %v503 = vrot.slane %v502, 2
        %v504 = vadd.f32 %v502, %v503
        %v505 = vrot.slane %v504, 1
        %v506 = vadd.f32 %v504, %v505
        %v507 = vsel %vm265, %v478, 0.0
        %v508 = vrot.slane %v507, 4
        %v509 = vadd.f32 %v507, %v508
        %v510 = vrot.slane %v509, 2
        %v511 = vadd.f32 %v509, %v510
        %v512 = vrot.slane %v511, 1
        %v513 = vadd.f32 %v511, %v512
        %v519 = vsel %vm442, %v492, %v485
        %v520 = vsel %vm444, %v499, %v519
        %v521 = vsel %vm446, %v506, %v520
        %v522 = vsel %vm448, %v513, %v521
        %v524 = vsub.f32 %v473, %v522
        %s525 = scalar_lea.vmem %s224, 16 [#allocation2]
        %v526 = vld [vmem:[%s525] sm:$0x3f]
        %v527 = vsel %vm265, %v526, -inf
        %v528 = vrot.slane %v527, 4
        %v529 = vmax.f32 %v527, %v528
        %v530 = vrot.slane %v529, 2
        %v531 = vmax.f32 %v529, %v530
        %v532 = vrot.slane %v531, 1
        %v533 = vmax.f32 %v531, %v532
        %v534 = vsub.f32 %v526, %v533
        %v535 = vmul.f32 %v534, 1.442695
        %v536 = vpow.pop %v535
        %v537 = vsel %vm265, %v536, 0.0
        %v538 = vrot.slane %v537, 4
        %v539 = vadd.f32 %v537, %v538
        %v540 = vrot.slane %v539, 2
        %v541 = vadd.f32 %v539, %v540
        %v542 = vrot.slane %v541, 1
        %v543 = vadd.f32 %v541, %v542
        %v544 = vlog2.pop %v543
        %v545 = vmul.f32 %v544, 0.6931472
        %v546 = vadd.f32 %v533, %v545
        %v547 = vmul.f32 %v526, %v371
        %v548 = vmul.f32 %v526, %v372
        %v549 = vmul.f32 %v526, %v373
        %v550 = vmul.f32 %v526, %v374
        %v551 = vmul.f32 %v526, %v375
        %v552 = vsel %vm265, %v547, 0.0
        %v553 = vrot.slane %v552, 4
        %v554 = vadd.f32 %v552, %v553
        %v555 = vrot.slane %v554, 2
        %v556 = vadd.f32 %v554, %v555
        %v557 = vrot.slane %v556, 1
        %v558 = vadd.f32 %v556, %v557
        %v559 = vsel %vm265, %v548, 0.0
        %v560 = vrot.slane %v559, 4
        %v561 = vadd.f32 %v559, %v560
        %v562 = vrot.slane %v561, 2
        %v563 = vadd.f32 %v561, %v562
        %v564 = vrot.slane %v563, 1
        %v565 = vadd.f32 %v563, %v564
        %v566 = vsel %vm265, %v549, 0.0
        %v567 = vrot.slane %v566, 4
        %v568 = vadd.f32 %v566, %v567
        %v569 = vrot.slane %v568, 2
        %v570 = vadd.f32 %v568, %v569
        %v571 = vrot.slane %v570, 1
        %v572 = vadd.f32 %v570, %v571
        %v573 = vsel %vm265, %v550, 0.0
        %v574 = vrot.slane %v573, 4
        %v575 = vadd.f32 %v573, %v574
        %v576 = vrot.slane %v575, 2
        %v577 = vadd.f32 %v575, %v576
        %v578 = vrot.slane %v577, 1
        %v579 = vadd.f32 %v577, %v578
        %v580 = vsel %vm265, %v551, 0.0
        %v581 = vrot.slane %v580, 4
        %v582 = vadd.f32 %v580, %v581
        %v583 = vrot.slane %v582, 2
        %v584 = vadd.f32 %v582, %v583
        %v585 = vrot.slane %v584, 1
        %v586 = vadd.f32 %v584, %v585
        %v592 = vsel %vm442, %v565, %v558
        %v593 = vsel %vm444, %v572, %v592
        %v594 = vsel %vm446, %v579, %v593
        %v595 = vsel %vm448, %v586, %v594
        %v597 = vsub.f32 %v546, %v595
        %s598 = scalar_lea.vmem %s224, 24 [#allocation2]
        %v599 = vld [vmem:[%s598] sm:$0x3f]
        %v600 = vsel %vm265, %v599, -inf
        %v601 = vrot.slane %v600, 4
        %v602 = vmax.f32 %v600, %v601
        %v603 = vrot.slane %v602, 2
        %v604 = vmax.f32 %v602, %v603
        %v605 = vrot.slane %v604, 1
        %v606 = vmax.f32 %v604, %v605
        %v607 = vsub.f32 %v599, %v606
        %v608 = vmul.f32 %v607, 1.442695
        %v609 = vpow.pop %v608
        %v610 = vsel %vm265, %v609, 0.0
        %v611 = vrot.slane %v610, 4
        %v612 = vadd.f32 %v610, %v611
        %v613 = vrot.slane %v612, 2
        %v614 = vadd.f32 %v612, %v613
        %v615 = vrot.slane %v614, 1
        %v616 = vadd.f32 %v614, %v615
        %v617 = vlog2.pop %v616
        %v618 = vmul.f32 %v617, 0.6931472
        %v619 = vadd.f32 %v606, %v618
        %v620 = vmul.f32 %v599, %v371
        %v621 = vmul.f32 %v599, %v372
        %v622 = vmul.f32 %v599, %v373
        %v623 = vmul.f32 %v599, %v374
        %v624 = vmul.f32 %v599, %v375
        %v625 = vsel %vm265, %v620, 0.0
        %v626 = vrot.slane %v625, 4
        %v627 = vadd.f32 %v625, %v626
        %v628 = vrot.slane %v627, 2
        %v629 = vadd.f32 %v627, %v628
        %v630 = vrot.slane %v629, 1
        %v631 = vadd.f32 %v629, %v630
        %v632 = vsel %vm265, %v621, 0.0
        %v633 = vrot.slane %v632, 4
        %v634 = vadd.f32 %v632, %v633
        %v635 = vrot.slane %v634, 2
        %v636 = vadd.f32 %v634, %v635
        %v637 = vrot.slane %v636, 1
        %v638 = vadd.f32 %v636, %v637
        %v639 = vsel %vm265, %v622, 0.0
        %v640 = vrot.slane %v639, 4
        %v641 = vadd.f32 %v639, %v640
        %v642 = vrot.slane %v641, 2
        %v643 = vadd.f32 %v641, %v642
        %v644 = vrot.slane %v643, 1
        %v645 = vadd.f32 %v643, %v644
        %v646 = vsel %vm265, %v623, 0.0
        %v647 = vrot.slane %v646, 4
        %v648 = vadd.f32 %v646, %v647
        %v649 = vrot.slane %v648, 2
        %v650 = vadd.f32 %v648, %v649
        %v651 = vrot.slane %v650, 1
        %v652 = vadd.f32 %v650, %v651
        %v653 = vsel %vm265, %v624, 0.0
        %v654 = vrot.slane %v653, 4
        %v655 = vadd.f32 %v653, %v654
        %v656 = vrot.slane %v655, 2
        %v657 = vadd.f32 %v655, %v656
        %v658 = vrot.slane %v657, 1
        %v659 = vadd.f32 %v657, %v658
        %v665 = vsel %vm442, %v638, %v631
        %v666 = vsel %vm444, %v645, %v665
        %v667 = vsel %vm446, %v652, %v666
        %v668 = vsel %vm448, %v659, %v667
        %v670 = vsub.f32 %v619, %v668
        %s671 = scalar_lea.vmem %s224, 32 [#allocation2]
        %v672 = vld [vmem:[%s671] sm:$0x3f]
        %v673 = vsel %vm265, %v672, -inf
        %v674 = vrot.slane %v673, 4
        %v675 = vmax.f32 %v673, %v674
        %v676 = vrot.slane %v675, 2
        %v677 = vmax.f32 %v675, %v676
        %v678 = vrot.slane %v677, 1
        %v679 = vmax.f32 %v677, %v678
        %v680 = vsub.f32 %v672, %v679
        %v681 = vmul.f32 %v680, 1.442695
        %v682 = vpow.pop %v681
        %v683 = vsel %vm265, %v682, 0.0
        %v684 = vrot.slane %v683, 4
        %v685 = vadd.f32 %v683, %v684
        %v686 = vrot.slane %v685, 2
        %v687 = vadd.f32 %v685, %v686
        %v688 = vrot.slane %v687, 1
        %v689 = vadd.f32 %v687, %v688
        %v690 = vlog2.pop %v689
        %v691 = vmul.f32 %v690, 0.6931472
        %v692 = vadd.f32 %v679, %v691
        %v693 = vmul.f32 %v672, %v371
        %v694 = vmul.f32 %v672, %v372
        %v695 = vmul.f32 %v672, %v373
        %v696 = vmul.f32 %v672, %v374
        %v697 = vmul.f32 %v672, %v375
        %v698 = vsel %vm265, %v693, 0.0
        %v699 = vrot.slane %v698, 4
        %v700 = vadd.f32 %v698, %v699
        %v701 = vrot.slane %v700, 2
        %v702 = vadd.f32 %v700, %v701
        %v703 = vrot.slane %v702, 1
        %v704 = vadd.f32 %v702, %v703
        %v705 = vsel %vm265, %v694, 0.0
        %v706 = vrot.slane %v705, 4
        %v707 = vadd.f32 %v705, %v706
        %v708 = vrot.slane %v707, 2
        %v709 = vadd.f32 %v707, %v708
        %v710 = vrot.slane %v709, 1
        %v711 = vadd.f32 %v709, %v710
        %v712 = vsel %vm265, %v695, 0.0
        %v713 = vrot.slane %v712, 4
        %v714 = vadd.f32 %v712, %v713
        %v715 = vrot.slane %v714, 2
        %v716 = vadd.f32 %v714, %v715
        %v717 = vrot.slane %v716, 1
        %v718 = vadd.f32 %v716, %v717
        %v719 = vsel %vm265, %v696, 0.0
        %v720 = vrot.slane %v719, 4
        %v721 = vadd.f32 %v719, %v720
        %v722 = vrot.slane %v721, 2
        %v723 = vadd.f32 %v721, %v722
        %v724 = vrot.slane %v723, 1
        %v725 = vadd.f32 %v723, %v724
        %v726 = vsel %vm265, %v697, 0.0
        %v727 = vrot.slane %v726, 4
        %v728 = vadd.f32 %v726, %v727
        %v729 = vrot.slane %v728, 2
        %v730 = vadd.f32 %v728, %v729
        %v731 = vrot.slane %v730, 1
        %v732 = vadd.f32 %v730, %v731
        %v738 = vsel %vm442, %v711, %v704
        %v739 = vsel %vm444, %v718, %v738
        %v740 = vsel %vm446, %v725, %v739
        %v741 = vsel %vm448, %v732, %v740
        %v743 = vsub.f32 %v692, %v741
        %v745 = vrot.slane %v524, 3
        %v748 = vrot.slane %v597, 6
        %v751 = vrot.slane %v670, 1
        %v754 = vrot.slane %v743, 4
        %vm756 = vcmask 1044480
        %v757 = vsel %vm756, %v451, %v745
        %vm758 = vcmask 1041408
        %v759 = vsel %vm758, %v745, %v748
        %vm760 = vcmask 1046528
        %v761 = vsel %vm760, %v759, %v751
        %vm762 = vcmask 1043456
        %v763 = vsel %vm762, %v751, %v754
        %v764 = vld [vmem:[%s0] sm:$0xff]
        %v765 = vld [vmem:[%s0 + $0x8] sm:$0xff]
        %v766 = vld [vmem:[%s0 + $0x10] sm:$0xff]
        %v767 = vld [vmem:[%s0 + $0x18] sm:$0xff]
        %v768 = vld [vmem:[%s0 + $0x20] sm:$0xff]
        %v769 = vld [vmem:[%s0 + $0x28] sm:$0xff]
        %v770 = vld [vmem:[%s0 + $0x30] sm:$0xff]
        %v771 = vld [vmem:[%s0 + $0x38] sm:$0xff]
        %v772 = vld [vmem:[%s0 + $0x40] sm:$0xff]
        %v773 = vld [vmem:[%s0 + $0x48] sm:$0xff]
        %v774 = vld [vmem:[%s0 + $0x50] sm:$0xff]
        %v775 = vld [vmem:[%s0 + $0x58] sm:$0xff]
        %v776 = vld [vmem:[%s0 + $0x60] sm:$0xff]
        %v777 = vld [vmem:[%s0 + $0x68] sm:$0xff]
        %v778 = vld [vmem:[%s0 + $0x70] sm:$0xff]
        %vm779 = vcmask 203776
        %v781 = vsel %vm779, %v764, 0
        %v784 = vsel %vm779, %v765, 0
        %v787 = vsel %vm779, %v766, 0
        %v790 = vsel %vm779, %v767, 0
        %v793 = vsel %vm779, %v768, 0
        %v796 = vsel %vm779, %v769, 0
        %v799 = vsel %vm779, %v770, 0
        %v802 = vsel %vm779, %v771, 0
        %v805 = vsel %vm779, %v772, 0
        %v808 = vsel %vm779, %v773, 0
        %v811 = vsel %vm779, %v774, 0
        %v814 = vsel %vm779, %v775, 0
        %v817 = vsel %vm779, %v776, 0
        %v820 = vsel %vm779, %v777, 0
        %v823 = vsel %vm779, %v778, 0
        %vm825 = vcmask 1040384
        %v826 = vsel %vm825, %v754, 0
        %828 = vmatprep.subr.mxu0 0.0
        %829 = vmatpush1.msra.mxu0 0.0
        %830 = vmatprep.subr.mxu0 0.0
        %831 = vmatpush1.msra.mxu0 0.0
        %832 = vmatprep.subr.mxu0 0.0
        %833 = vmatpush1.msra.mxu0 0.0
        %834 = vmatprep.subr.mxu0 0.0
        %835 = vmatpush1.msra.mxu0 0.0
        %836 = vmatprep.subr.mxu0 0.0
        %837 = vmatpush1.msra.mxu0 0.0
        %838 = vmatprep.subr.mxu0 0.0
        %839 = vmatpush1.msra.mxu0 0.0
        %840 = vmatprep.subr.mxu0 0.0
        %841 = vmatpush1.msra.mxu0 0.0
        %842 = vmatprep.subr.mxu0 0.0
        %843 = vmatpush1.msra.mxu0 0.0
        %844 = vmatprep.subr.mxu0 0.0
        %845 = vmatpush1.msra.mxu0 0.0
        %846 = vmatprep.subr.mxu0 0.0
        %847 = vmatpush1.msra.mxu0 0.0
        %848 = vmatprep.subr.mxu0 0.0
        %849 = vmatpush1.msra.mxu0 0.0
        %850 = vmatprep.subr.mxu0 0.0
        %851 = vmatpush1.msra.mxu0 0.0
        %852 = vmatprep.subr.mxu0 0.0
        %853 = vmatpush1.msra.mxu0 %v826
        %854 = vmatprep.subr.mxu0 0.0
        %855 = vmatpush1.msra.mxu0 %v763
        %856 = vmatprep.subr.mxu0 0.0
        %857 = vmatpush1.msra.mxu0 %v761
        %858 = vmatprep.subr.mxu0 0.0
        %859 = vmatpush1.msra.mxu0 %v757
        %860 = vmatprep.subr.mxu0 0.0
        %861 = vmatpush2.msra.mxu0 0.0
        %862 = vmatprep.subr.mxu0 0.0
        %863 = vmatpush2.msra.mxu0 0.0
        %864 = vmatprep.subr.mxu0 0.0
        %865 = vmatpush2.msra.mxu0 0.0
        %866 = vmatprep.subr.mxu0 0.0
        %867 = vmatpush2.msra.mxu0 0.0
        %868 = vmatprep.subr.mxu0 0.0
        %869 = vmatpush2.msra.mxu0 0.0
        %870 = vmatprep.subr.mxu0 0.0
        %871 = vmatpush2.msra.mxu0 0.0
        %872 = vmatprep.subr.mxu0 0.0
        %873 = vmatpush2.msra.mxu0 0.0
        %874 = vmatprep.subr.mxu0 0.0
        %875 = vmatpush2.msra.mxu0 0.0
        %876 = vmatprep.subr.mxu0 0.0
        %877 = vmatpush2.msra.mxu0 0.0
        %878 = vmatprep.subr.mxu0 0.0
        %879 = vmatpush2.msra.mxu0 0.0
        %880 = vmatprep.subr.mxu0 0.0
        %881 = vmatpush2.msra.mxu0 0.0
        %882 = vmatprep.subr.mxu0 0.0
        %883 = vmatpush2.msra.mxu0 0.0
        %884 = vmatprep.subr.mxu0 0.0
        %885 = vmatpush2.msra.mxu0 0.0
        %886 = vmatprep.subr.mxu0 0.0
        %887 = vmatpush2.msra.mxu0 0.0
        %888 = vmatprep.subr.mxu0 0.0
        %889 = vmatpush2.msra.mxu0 0.0
        %890 = vmatprep.subr.mxu0 0.0
        %891 = vmatpush2.msra.mxu0 0.0
        %892 = vmatprep.mubr.f32.mxu0 0.0
        %893 = vmatmul.mubr.f32.gmra.mxu0 %v781
        %v894 = vpop.f32.mrf.mxu0
        %v895 = vadd.f32 0.0, %v894
        %v896 = vpop.f32.mrf.mxu0
        %897 = vmatprep.mubr.f32.mxu0 0.0
        %898 = vmatmul.mubr.f32.gmra.mxu0 %v784
        %v899 = vpop.f32.mrf.mxu0
        %v900 = vadd.f32 0.0, %v899
        %v901 = vpop.f32.mrf.mxu0
        %902 = vmatprep.mubr.f32.mxu0 0.0
        %903 = vmatmul.mubr.f32.gmra.mxu0 %v787
        %v904 = vpop.f32.mrf.mxu0
        %v905 = vadd.f32 0.0, %v904
        %v906 = vpop.f32.mrf.mxu0
        %907 = vmatprep.mubr.f32.mxu0 0.0
        %908 = vmatmul.mubr.f32.gmra.mxu0 %v790
        %v909 = vpop.f32.mrf.mxu0
        %v910 = vadd.f32 0.0, %v909
        %v911 = vpop.f32.mrf.mxu0
        %912 = vmatprep.mubr.f32.mxu0 0.0
        %913 = vmatmul.mubr.f32.gmra.mxu0 %v793
        %v914 = vpop.f32.mrf.mxu0
        %v915 = vadd.f32 0.0, %v914
        %v916 = vpop.f32.mrf.mxu0
        %917 = vmatprep.mubr.f32.mxu0 0.0
        %918 = vmatmul.mubr.f32.gmra.mxu0 %v796
        %v919 = vpop.f32.mrf.mxu0
        %v920 = vadd.f32 0.0, %v919
        %v921 = vpop.f32.mrf.mxu0
        %922 = vmatprep.mubr.f32.mxu0 0.0
        %923 = vmatmul.mubr.f32.gmra.mxu0 %v799
        %v924 = vpop.f32.mrf.mxu0
        %v925 = vadd.f32 0.0, %v924
        %v926 = vpop.f32.mrf.mxu0
        %927 = vmatprep.mubr.f32.mxu0 0.0
        %928 = vmatmul.mubr.f32.gmra.mxu0 %v802
        %v929 = vpop.f32.mrf.mxu0
        %v930 = vadd.f32 0.0, %v929
        %v931 = vpop.f32.mrf.mxu0
        %932 = vmatprep.mubr.f32.mxu0 0.0
        %933 = vmatmul.mubr.f32.gmra.mxu0 %v805
        %v934 = vpop.f32.mrf.mxu0
        %v935 = vadd.f32 0.0, %v934
        %v936 = vpop.f32.mrf.mxu0
        %937 = vmatprep.mubr.f32.mxu0 0.0
        %938 = vmatmul.mubr.f32.gmra.mxu0 %v808
        %v939 = vpop.f32.mrf.mxu0
        %v940 = vadd.f32 0.0, %v939
        %v941 = vpop.f32.mrf.mxu0
        %942 = vmatprep.mubr.f32.mxu0 0.0
        %943 = vmatmul.mubr.f32.gmra.mxu0 %v811
        %v944 = vpop.f32.mrf.mxu0
        %v945 = vadd.f32 0.0, %v944
        %v946 = vpop.f32.mrf.mxu0
        %947 = vmatprep.mubr.f32.mxu0 0.0
        %948 = vmatmul.mubr.f32.gmra.mxu0 %v814
        %v949 = vpop.f32.mrf.mxu0
        %v950 = vadd.f32 0.0, %v949
        %v951 = vpop.f32.mrf.mxu0
        %952 = vmatprep.mubr.f32.mxu0 0.0
        %953 = vmatmul.mubr.f32.gmra.mxu0 %v817
        %v954 = vpop.f32.mrf.mxu0
        %v955 = vadd.f32 0.0, %v954
        %v956 = vpop.f32.mrf.mxu0
        %957 = vmatprep.mubr.f32.mxu0 0.0
        %958 = vmatmul.mubr.f32.gmra.mxu0 %v820
        %v959 = vpop.f32.mrf.mxu0
        %v960 = vadd.f32 0.0, %v959
        %v961 = vpop.f32.mrf.mxu0
        %962 = vmatprep.mubr.f32.mxu0 0.0
        %963 = vmatmul.mubr.f32.gmra.mxu0 %v823
        %v964 = vpop.f32.mrf.mxu0
        %v965 = vadd.f32 0.0, %v964
        %v966 = vpop.f32.mrf.mxu0
        %967 = vdwg.mxu0
        %v968 = vmin.f32 %v895, %v915
        %v969 = vmin.f32 %v900, %v920
        %v970 = vmin.f32 %v905, %v925
        %v971 = vmin.f32 %v910, %v930
        %v972 = vmin.f32 %v968, %v935
        %v973 = vmin.f32 %v969, %v940
        %v974 = vmin.f32 %v970, %v945
        %v975 = vmin.f32 %v971, %v950
        %v976 = vmin.f32 %v972, %v955
        %v977 = vmin.f32 %v973, %v960
        %v978 = vmin.f32 %v974, %v965
        %v979 = vmin.f32 %v976, %v977
        %v980 = vmin.f32 %v978, %v975
        %v981 = vmin.f32 %v979, %v980
        %v982 = vrot.slane %v981, 4
        %v983 = vmin.f32 %v981, %v982
        %v984 = vrot.slane %v983, 2
        %v985 = vmin.f32 %v983, %v984
        %v986 = vrot.slane %v985, 1
        %v987 = vmin.f32 %v985, %v986
        %v988 = vmul.f32 %v987, 0.2
        %989 = vst [vmem:[%s257] sm:$0x1] %v988
        %s990 = sand.u32 %s101, 1
        %s991 = scalar_lea.sflag [#allocation5], %s990
        %s992 = sand.u32 %s101, 1
        %s993 = scalar_lea.vmem [#allocation6], %s992
        // Predicated region
        $region75: #{tpu_custom_call.1} parent=65 // pred_check
          %p994 = pneg %p111
        $region76: #{tpu_custom_call.1} parent=65 // pred_check_branch
          %996 = sbr.rel (%p994) target = $region78
        $region77: #{tpu_custom_call.1} parent=65 // pred_region
          %s998 = ssub.s32 16, 16
          %999 = vsyncadd %s991, %s998
          %s1000 = smul.addr %s20, 16
          %s1001 = scalar_lea.hbm %s3, %s1000
          %s1003 = sshll.u32 %s993, 4
          %s1004 = int_to_ptr.vmem [resolvable:$true] %s1003
          %1006 = dma.vmem_to_hbm [thread:$0]  %s1004, 16, %s1001, %s991
        $region78: #{tpu_custom_call.1} parent=65 // pred_fallthru
          _
      $region66: #{tpu_custom_call.1} parent=5 // pred_fallthru
        _
      %p1007 = scmp.le.s32.totalorder 2, %s15
      // Predicated region
      $region79: #{tpu_custom_call.1} parent=5 // pred_check
        %p1008 = pneg %p1007
      $region80: #{tpu_custom_call.1} parent=5 // pred_check_branch
        %1010 = sbr.rel (%p1008) target = $region82
      $region81: #{tpu_custom_call.1} parent=5 // pred_region
        %s1011 = ssub.s32 %s15, 2
        // Predicated region
        $region83: #{tpu_custom_call.1} parent=81 // pred_check
          %p1012 = pneg %p117
        $region84: #{tpu_custom_call.1} parent=81 // pred_check_branch
          %1014 = sbr.rel (%p1012) target = $region86
        $region85: #{tpu_custom_call.1} parent=81 // pred_region
          %s1015 = sand.u32 %s102, 1
          %s1016 = scalar_lea.sflag [#allocation5], %s1015
          %s1017 = sand.u32 %s102, 1
          %s1018 = scalar_lea.vmem [#allocation6], %s1017
          %1019 = dma.done %s1016, 16
        $region86: #{tpu_custom_call.1} parent=81 // pred_fallthru
          _
      $region82: #{tpu_custom_call.1} parent=5 // pred_fallthru
        _
    $region6: #{tpu_custom_call.1} parent=1 // loop_footer
      %s19 = sadd.s32 1, %s15
    $region7: #{tpu_custom_call.1} parent=1 // loop_footer_branch
      %14 = sbr.rel target = $region3
    $region8: #{tpu_custom_call.1} parent=1 // loop_exit
      _
    %1020 = vsyncpa [#allocation4], 1
    %s1021 = scalar_lea.sflag [#allocation4], 1
    %1022 = vsyncpa %s1021, 1
    %1023 = vsyncpa [#allocation5], 1
    %s1024 = scalar_lea.sflag [#allocation5], 1
    %1025 = vsyncpa %s1024, 1

</llo_original>
